<compile_context>
chip_gen: v7x
topology: tpu7x:2x2x1
jax: 0.10.0
libtpu: 0.0.40
codegen_flags: <defaults>
</compile_context>

<pallas_src>
import functools
import jax
import jax.numpy as jnp
from jax.experimental import pallas as pl
from jax.experimental.pallas import tpu as pltpu


def _round_up(x, m):
    return (x + m - 1) // m * m


def _dqn_kernel(use_bf16,
                s_ref, b1_ref, sp_ref,
                we1, we2, wb2, wi1, wi2, wv,
                out_ref):
    """One batch tile (TB rows) per grid step; all hot-path compute stays in-kernel."""
    f32 = jnp.float32
    cdt = jnp.bfloat16 if use_bf16 else jnp.float32     # matmul operand dtype

    x = s_ref[...].astype(cdt)                          # (TB, D)
    b = b1_ref[...]                                     # (TB, 1) f32

    # Packed small params (one (8, A_pad) f32 tile):
    #   rows 0..6 = biases be1, be2, bb1, bb2, bi1, bi2, bv ; row 7 = wb1 row vector.
    be1 = sp_ref[0:1, :128]
    be2 = sp_ref[1:2, :128]
    bb1 = sp_ref[2:3, :64]
    bb2 = sp_ref[3:4, :128]
    bi1 = sp_ref[4:5, :128]
    bi2 = sp_ref[5:6, :128]
    bv = sp_ref[6:7, :]                                 # (1, A_pad)
    wb1 = sp_ref[7:8, :64]                              # (1, 64)

    # --- s_encoder: Linear(D,128) -> ReLU -> Linear(128,128)
    h = jnp.maximum(jnp.dot(x, we1[...], preferred_element_type=f32) + be1, 0.0)
    h = jnp.dot(h.astype(cdt), we2[...], preferred_element_type=f32) + be2      # (TB,128)

    # --- b1_fc: Linear(1,64) -> ReLU -> Linear(64,128)
    # K=1 first layer as a VPU broadcast multiply (not an MXU matmul).
    hb = jnp.maximum(b * wb1 + bb1, 0.0)                                        # (TB,64)
    zb = jnp.dot(hb.astype(cdt), wb2[...], preferred_element_type=f32) + bb2    # (TB,128)

    # --- int_layer on (h + z_b1): Linear(128,128) -> ReLU -> Linear(128,128)
    z = h + zb
    z = jnp.maximum(jnp.dot(z.astype(cdt), wi1[...], preferred_element_type=f32) + bi1, 0.0)
    z = jnp.dot(z.astype(cdt), wi2[...], preferred_element_type=f32) + bi2      # (TB,128)

    # --- v_fc head (action_dim zero-padded to lane width)
    q = jnp.dot(z.astype(cdt), wv[...], preferred_element_type=f32) + bv        # (TB,A_pad)
    out_ref[...] = q.astype(out_ref.dtype)


def dqn_forward(s, b1, params, *, use_bf16=True, max_tile=512):
    """s: (B, state_dim) f32, b1: (B, 1) f32 -> (B, action_dim) f32."""
    B, D = s.shape
    A = params['wv'].shape[1]
    A_pad = _round_up(A, 128)                 # lane-dense output block width

    TB = min(max_tile, _round_up(B, 8))       # batch tile: multiple of 8, capped
    B_pad = _round_up(B, TB)

    s_p = jnp.pad(s.astype(jnp.float32), ((0, B_pad - B), (0, 0)))
    b1_p = jnp.pad(b1.astype(jnp.float32), ((0, B_pad - B), (0, 0)))

    cdt = jnp.bfloat16 if use_bf16 else jnp.float32
    we1 = params['we1'].astype(cdt)
    we2 = params['we2'].astype(cdt)
    wb2 = params['wb2'].astype(cdt)
    wi1 = params['wi1'].astype(cdt)
    wi2 = params['wi2'].astype(cdt)
    wv = jnp.pad(params['wv'], ((0, 0), (0, A_pad - A))).astype(cdt)

    # Pack the 7 biases + the (1,64) wb1 row into one (8, A_pad) f32 tile (kept f32 so
    # bias adds / the b1 broadcast run on the f32 VPU path on all generations).
    def _row(v):
        v = jnp.reshape(v, (1, -1)).astype(jnp.float32)
        return jnp.pad(v, ((0, 0), (0, A_pad - v.shape[1])))

    sp = jnp.concatenate(
        [_row(params['be1']), _row(params['be2']), _row(params['bb1']),
         _row(params['bb2']), _row(params['bi1']), _row(params['bi2']),
         _row(params['bv']), _row(params['wb1'])], axis=0)              # (8, A_pad)

    def full(arr):
        return pl.BlockSpec(arr.shape, lambda i: (0, 0))

    out_p = pl.pallas_call(
        functools.partial(_dqn_kernel, use_bf16),
        out_shape=jax.ShapeDtypeStruct((B_pad, A_pad), jnp.float32),
        grid=(B_pad // TB,),
        in_specs=[pl.BlockSpec((TB, D), lambda i: (i, 0)),
                  pl.BlockSpec((TB, 1), lambda i: (i, 0)),
                  full(sp), full(we1), full(we2), full(wb2),
                  full(wi1), full(wi2), full(wv)],
        out_specs=pl.BlockSpec((TB, A_pad), lambda i: (i, 0)),
        compiler_params=pltpu.CompilerParams(
            dimension_semantics=("parallel",)),
    )(s_p, b1_p, sp, we1, we2, wb2, wi1, wi2, wv)

    return out_p[:B, :A]


def init_params(key, state_dim, action_dim):
    """Deterministic init mimicking PyTorch nn.Linear default (U[-1/sqrt(fan_in), ...])."""
    def linear(k, fin, fout):
        kw, kb = jax.random.split(k)
        bound = 1.0 / float(fin) ** 0.5
        w = jax.random.uniform(kw, (fin, fout), jnp.float32, -bound, bound)
        b = jax.random.uniform(kb, (1, fout), jnp.float32, -bound, bound)
        return w, b

    keys = jax.random.split(key, 7)
    p = {}
    p['we1'], p['be1'] = linear(keys[0], state_dim, 128)
    p['we2'], p['be2'] = linear(keys[1], 128, 128)
    p['wb1'], p['bb1'] = linear(keys[2], 1, 64)
    p['wb2'], p['bb2'] = linear(keys[3], 64, 128)
    p['wi1'], p['bi1'] = linear(keys[4], 128, 128)
    p['wi2'], p['bi2'] = linear(keys[5], 128, 128)
    p['wv'], p['bv'] = linear(keys[6], 128, action_dim)
    return p


def dqn_ref(s, b1, params):
    """Pure-JAX reference of the PyTorch forward (for correctness check)."""
    h = jnp.maximum(s @ params['we1'] + params['be1'], 0.0)
    h = h @ params['we2'] + params['be2']
    h = h.reshape(s.shape[0], -1)          # mirrors .view(s.size(0), -1) (identity for 2-D s)
    hb = jnp.maximum(b1 @ params['wb1'] + params['bb1'], 0.0)
    zb = hb @ params['wb2'] + params['bb2']
    z = h + zb
    z = jnp.maximum(z @ params['wi1'] + params['bi1'], 0.0)
    z = z @ params['wi2'] + params['bi2']
    return z @ params['wv'] + params['bv']


if __name__ == "__main__":
    B, D, A = 2, 16, 5                     # batch, state_dim, action_dim

    key = jax.random.PRNGKey(0)
    ks, kb, kp = jax.random.split(key, 3)
    s = jax.random.normal(ks, (B, D), jnp.float32)
    b1 = jax.random.normal(kb, (B, 1), jnp.float32)
    params = init_params(kp, D, A)

    q_ref = dqn_ref(s, b1, params)

    # f32 matmul path: must match the reference tightly.
    q32 = jax.block_until_ready(dqn_forward(s, b1, params, use_bf16=False))
    assert q32.shape == (B, A)
    assert jnp.allclose(q32, q_ref, atol=1e-4, rtol=1e-4), float(jnp.max(jnp.abs(q32 - q_ref)))

    # bf16 matmul operands with f32 accumulation: looser tolerance.
    qbf = jax.block_until_ready(dqn_forward(s, b1, params, use_bf16=True))
    assert qbf.shape == (B, A)
    assert jnp.allclose(qbf, q_ref, atol=5e-2, rtol=5e-2), float(jnp.max(jnp.abs(qbf - q_ref)))

    print("KERNEL_OK")
</pallas_src>

<mosaic_0001>
module attributes {stable_mosaic.version = 11 : i64} {
  func.func @_dqn_kernel(%arg0: i32, %arg1: memref<8x16xf32, #tpu.memory_space<vmem>>, %arg2: memref<8x1xf32, #tpu.memory_space<vmem>>, %arg3: memref<8x128xf32, #tpu.memory_space<vmem>>, %arg4: memref<16x128xf32, #tpu.memory_space<vmem>>, %arg5: memref<128x128xf32, #tpu.memory_space<vmem>>, %arg6: memref<64x128xf32, #tpu.memory_space<vmem>>, %arg7: memref<128x128xf32, #tpu.memory_space<vmem>>, %arg8: memref<128x128xf32, #tpu.memory_space<vmem>>, %arg9: memref<128x128xf32, #tpu.memory_space<vmem>>, %arg10: memref<8x128xf32, #tpu.memory_space<vmem>>) attributes {dimension_semantics = [#tpu.dimension_semantics<parallel>], iteration_bounds = array<i64: 1>, scalar_prefetch = 0 : i64, scratch_operands = 0 : i64, tpu.core_type = #tpu.core_type<tc>, window_params = [{transform_indices = @transform_0, window_bounds = array<i64: 8, 16>}, {transform_indices = @transform_1, window_bounds = array<i64: 8, 1>}, {pipeline_mode = #tpu.pipeline_mode<synchronous>, transform_indices = @transform_2, window_bounds = array<i64: 8, 128>}, {pipeline_mode = #tpu.pipeline_mode<synchronous>, transform_indices = @transform_3, window_bounds = array<i64: 16, 128>}, {pipeline_mode = #tpu.pipeline_mode<synchronous>, transform_indices = @transform_4, window_bounds = array<i64: 128, 128>}, {pipeline_mode = #tpu.pipeline_mode<synchronous>, transform_indices = @transform_5, window_bounds = array<i64: 64, 128>}, {pipeline_mode = #tpu.pipeline_mode<synchronous>, transform_indices = @transform_6, window_bounds = array<i64: 128, 128>}, {pipeline_mode = #tpu.pipeline_mode<synchronous>, transform_indices = @transform_7, window_bounds = array<i64: 128, 128>}, {pipeline_mode = #tpu.pipeline_mode<synchronous>, transform_indices = @transform_8, window_bounds = array<i64: 128, 128>}, {transform_indices = @transform_9, window_bounds = array<i64: 8, 128>}]} {
    %c0 = arith.constant 0 : index
    %c0_0 = arith.constant 0 : index
    %0 = vector.load %arg1[%c0, %c0_0] : memref<8x16xf32, #tpu.memory_space<vmem>>, vector<8x16xf32>
    %c0_1 = arith.constant 0 : index
    %c0_2 = arith.constant 0 : index
    %1 = vector.load %arg2[%c0_1, %c0_2] : memref<8x1xf32, #tpu.memory_space<vmem>>, vector<8x1xf32>
    %c0_3 = arith.constant 0 : index
    %c0_4 = arith.constant 0 : index
    %2 = vector.load %arg3[%c0_3, %c0_4] : memref<8x128xf32, #tpu.memory_space<vmem>>, vector<1x128xf32>
    %c1 = arith.constant 1 : index
    %c0_5 = arith.constant 0 : index
    %3 = vector.load %arg3[%c1, %c0_5] : memref<8x128xf32, #tpu.memory_space<vmem>>, vector<1x128xf32>
    %c2 = arith.constant 2 : index
    %c0_6 = arith.constant 0 : index
    %4 = vector.load %arg3[%c2, %c0_6] : memref<8x128xf32, #tpu.memory_space<vmem>>, vector<1x64xf32>
    %c3 = arith.constant 3 : index
    %c0_7 = arith.constant 0 : index
    %5 = vector.load %arg3[%c3, %c0_7] : memref<8x128xf32, #tpu.memory_space<vmem>>, vector<1x128xf32>
    %c4 = arith.constant 4 : index
    %c0_8 = arith.constant 0 : index
    %6 = vector.load %arg3[%c4, %c0_8] : memref<8x128xf32, #tpu.memory_space<vmem>>, vector<1x128xf32>
    %c5 = arith.constant 5 : index
    %c0_9 = arith.constant 0 : index
    %7 = vector.load %arg3[%c5, %c0_9] : memref<8x128xf32, #tpu.memory_space<vmem>>, vector<1x128xf32>
    %c6 = arith.constant 6 : index
    %c0_10 = arith.constant 0 : index
    %8 = vector.load %arg3[%c6, %c0_10] : memref<8x128xf32, #tpu.memory_space<vmem>>, vector<1x128xf32>
    %c7 = arith.constant 7 : index
    %c0_11 = arith.constant 0 : index
    %9 = vector.load %arg3[%c7, %c0_11] : memref<8x128xf32, #tpu.memory_space<vmem>>, vector<1x64xf32>
    %c0_12 = arith.constant 0 : index
    %c0_13 = arith.constant 0 : index
    %10 = vector.load %arg4[%c0_12, %c0_13] : memref<16x128xf32, #tpu.memory_space<vmem>>, vector<16x128xf32>
    %cst = arith.constant dense<0.000000e+00> : vector<8x128xf32>
    %11 = tpu.matmul %0, %10, %cst {dimension_numbers = #tpu.dot_dimension_numbers<[1], [0], [0], [1], [0, 0, 1, 1], [], []>} : vector<8x16xf32>, vector<16x128xf32>, vector<8x128xf32> -> vector<8x128xf32>
    %12 = vector.broadcast %2 : vector<1x128xf32> to vector<8x128xf32>
    %13 = arith.addf %11, %12 : vector<8x128xf32>
    %cst_14 = arith.constant 0.000000e+00 : f32
    %14 = vector.broadcast %cst_14 : f32 to vector<8x128xf32>
    %15 = arith.maximumf %13, %14 : vector<8x128xf32>
    %c0_15 = arith.constant 0 : index
    %c0_16 = arith.constant 0 : index
    %16 = vector.load %arg5[%c0_15, %c0_16] : memref<128x128xf32, #tpu.memory_space<vmem>>, vector<128x128xf32>
    %cst_17 = arith.constant dense<0.000000e+00> : vector<8x128xf32>
    %17 = tpu.matmul %15, %16, %cst_17 {dimension_numbers = #tpu.dot_dimension_numbers<[1], [0], [0], [1], [0, 0, 1, 1], [], []>} : vector<8x128xf32>, vector<128x128xf32>, vector<8x128xf32> -> vector<8x128xf32>
    %18 = vector.broadcast %3 : vector<1x128xf32> to vector<8x128xf32>
    %19 = arith.addf %17, %18 : vector<8x128xf32>
    %20 = vector.broadcast %1 : vector<8x1xf32> to vector<8x64xf32>
    %21 = vector.broadcast %9 : vector<1x64xf32> to vector<8x64xf32>
    %22 = arith.mulf %20, %21 : vector<8x64xf32>
    %23 = vector.broadcast %4 : vector<1x64xf32> to vector<8x64xf32>
    %24 = arith.addf %22, %23 : vector<8x64xf32>
    %cst_18 = arith.constant 0.000000e+00 : f32
    %25 = vector.broadcast %cst_18 : f32 to vector<8x64xf32>
    %26 = arith.maximumf %24, %25 : vector<8x64xf32>
    %c0_19 = arith.constant 0 : index
    %c0_20 = arith.constant 0 : index
    %27 = vector.load %arg6[%c0_19, %c0_20] : memref<64x128xf32, #tpu.memory_space<vmem>>, vector<64x128xf32>
    %cst_21 = arith.constant dense<0.000000e+00> : vector<8x128xf32>
    %28 = tpu.matmul %26, %27, %cst_21 {dimension_numbers = #tpu.dot_dimension_numbers<[1], [0], [0], [1], [0, 0, 1, 1], [], []>} : vector<8x64xf32>, vector<64x128xf32>, vector<8x128xf32> -> vector<8x128xf32>
    %29 = vector.broadcast %5 : vector<1x128xf32> to vector<8x128xf32>
    %30 = arith.addf %28, %29 : vector<8x128xf32>
    %31 = arith.addf %19, %30 : vector<8x128xf32>
    %c0_22 = arith.constant 0 : index
    %c0_23 = arith.constant 0 : index
    %32 = vector.load %arg7[%c0_22, %c0_23] : memref<128x128xf32, #tpu.memory_space<vmem>>, vector<128x128xf32>
    %cst_24 = arith.constant dense<0.000000e+00> : vector<8x128xf32>
    %33 = tpu.matmul %31, %32, %cst_24 {dimension_numbers = #tpu.dot_dimension_numbers<[1], [0], [0], [1], [0, 0, 1, 1], [], []>} : vector<8x128xf32>, vector<128x128xf32>, vector<8x128xf32> -> vector<8x128xf32>
    %34 = vector.broadcast %6 : vector<1x128xf32> to vector<8x128xf32>
    %35 = arith.addf %33, %34 : vector<8x128xf32>
    %cst_25 = arith.constant 0.000000e+00 : f32
    %36 = vector.broadcast %cst_25 : f32 to vector<8x128xf32>
    %37 = arith.maximumf %35, %36 : vector<8x128xf32>
    %c0_26 = arith.constant 0 : index
    %c0_27 = arith.constant 0 : index
    %38 = vector.load %arg8[%c0_26, %c0_27] : memref<128x128xf32, #tpu.memory_space<vmem>>, vector<128x128xf32>
    %cst_28 = arith.constant dense<0.000000e+00> : vector<8x128xf32>
    %39 = tpu.matmul %37, %38, %cst_28 {dimension_numbers = #tpu.dot_dimension_numbers<[1], [0], [0], [1], [0, 0, 1, 1], [], []>} : vector<8x128xf32>, vector<128x128xf32>, vector<8x128xf32> -> vector<8x128xf32>
    %40 = vector.broadcast %7 : vector<1x128xf32> to vector<8x128xf32>
    %41 = arith.addf %39, %40 : vector<8x128xf32>
    %c0_29 = arith.constant 0 : index
    %c0_30 = arith.constant 0 : index
    %42 = vector.load %arg9[%c0_29, %c0_30] : memref<128x128xf32, #tpu.memory_space<vmem>>, vector<128x128xf32>
    %cst_31 = arith.constant dense<0.000000e+00> : vector<8x128xf32>
    %43 = tpu.matmul %41, %42, %cst_31 {dimension_numbers = #tpu.dot_dimension_numbers<[1], [0], [0], [1], [0, 0, 1, 1], [], []>} : vector<8x128xf32>, vector<128x128xf32>, vector<8x128xf32> -> vector<8x128xf32>
    %44 = vector.broadcast %8 : vector<1x128xf32> to vector<8x128xf32>
    %45 = arith.addf %43, %44 : vector<8x128xf32>
    %c0_32 = arith.constant 0 : index
    %c0_33 = arith.constant 0 : index
    %46 = vector.load %arg10[%c0_32, %c0_33] : memref<8x128xf32, #tpu.memory_space<vmem>>, vector<8x128xf32>
    tpu.vector_store %arg10[%c0_32, %c0_33], %45 {strides = array<i32>} : memref<8x128xf32, #tpu.memory_space<vmem>>, vector<8x128xf32>,
    return
  }
  func.func @transform_0(%arg0: i32) -> (i32, i32) {
    %c0_i32 = arith.constant 0 : i32
    %c0_i32_0 = arith.constant 0 : i32
    return %arg0, %c0_i32 : i32, i32
  }
  func.func @transform_1(%arg0: i32) -> (i32, i32) {
    %c0_i32 = arith.constant 0 : i32
    %c0_i32_0 = arith.constant 0 : i32
    return %arg0, %c0_i32 : i32, i32
  }
  func.func @transform_2(%arg0: i32) -> (i32, i32) {
    %c0_i32 = arith.constant 0 : i32
    %c0_i32_0 = arith.constant 0 : i32
    %c0_i32_1 = arith.constant 0 : i32
    return %c0_i32, %c0_i32_0 : i32, i32
  }
  func.func @transform_3(%arg0: i32) -> (i32, i32) {
    %c0_i32 = arith.constant 0 : i32
    %c0_i32_0 = arith.constant 0 : i32
    %c0_i32_1 = arith.constant 0 : i32
    return %c0_i32, %c0_i32_0 : i32, i32
  }
  func.func @transform_4(%arg0: i32) -> (i32, i32) {
    %c0_i32 = arith.constant 0 : i32
    %c0_i32_0 = arith.constant 0 : i32
    %c0_i32_1 = arith.constant 0 : i32
    return %c0_i32, %c0_i32_0 : i32, i32
  }
  func.func @transform_5(%arg0: i32) -> (i32, i32) {
    %c0_i32 = arith.constant 0 : i32
    %c0_i32_0 = arith.constant 0 : i32
    %c0_i32_1 = arith.constant 0 : i32
    return %c0_i32, %c0_i32_0 : i32, i32
  }
  func.func @transform_6(%arg0: i32) -> (i32, i32) {
    %c0_i32 = arith.constant 0 : i32
    %c0_i32_0 = arith.constant 0 : i32
    %c0_i32_1 = arith.constant 0 : i32
    return %c0_i32, %c0_i32_0 : i32, i32
  }
  func.func @transform_7(%arg0: i32) -> (i32, i32) {
    %c0_i32 = arith.constant 0 : i32
    %c0_i32_0 = arith.constant 0 : i32
    %c0_i32_1 = arith.constant 0 : i32
    return %c0_i32, %c0_i32_0 : i32, i32
  }
  func.func @transform_8(%arg0: i32) -> (i32, i32) {
    %c0_i32 = arith.constant 0 : i32
    %c0_i32_0 = arith.constant 0 : i32
    %c0_i32_1 = arith.constant 0 : i32
    return %c0_i32, %c0_i32_0 : i32, i32
  }
  func.func @transform_9(%arg0: i32) -> (i32, i32) {
    %c0_i32 = arith.constant 0 : i32
    %c0_i32_0 = arith.constant 0 : i32
    return %arg0, %c0_i32 : i32, i32
  }
}

</mosaic_0001>

<llo_original>
// kernel: tpu_custom_call.1
$region0: #{tpu_custom_call.1}
  #allocation0 [shape = 'u32[]', space=smem, size = 0x4, offset = 0x4, fixed_abs, tag = 'smem constant byte address 0x4 - core index']
  #allocation1 [shape = 'u32[144,128]{1,0:T(1,128)}', space=vmem, size = 0x12000, scoped, tag = 'internal scratch']
  %s0 = inlined_call_operand.hbm [shape: f32[8,16], index: 0, kind: input, shape index: {}]
  %s1 = inlined_call_operand.vmem [shape: f32[8,1], index: 1, kind: input, shape index: {}]
  %s2 = inlined_call_operand.hbm [shape: f32[8,128], index: 2, kind: input, shape index: {}]
  %s3 = inlined_call_operand.vmem [shape: f32[16,128], index: 3, kind: input, shape index: {}]
  %s4 = inlined_call_operand.hbm [shape: f32[128,128], index: 4, kind: input, shape index: {}]
  %s5 = inlined_call_operand.hbm [shape: f32[64,128], index: 5, kind: input, shape index: {}]
  %s6 = inlined_call_operand.hbm [shape: f32[128,128], index: 6, kind: input, shape index: {}]
  %s7 = inlined_call_operand.hbm [shape: f32[128,128], index: 7, kind: input, shape index: {}]
  %s8 = inlined_call_operand.hbm [shape: f32[128,128], index: 8, kind: input, shape index: {}]
  %s9 = inlined_call_operand.hbm [shape: f32[8,128], index: 9, kind: output, shape index: {}]
  %s10 = sld [smem:[#allocation0]]
  $region74: #{tpu_custom_call.1} parent=0
    _
  %s12 = ssub.s32 1, %s10
  %s13 = scalar_select 0, %s12, %s10
  $region1: #{tpu_custom_call.1} parent=0
    #allocation2 [shape = 'u8[4096]{0}', space=vmem, size = 0x1000, scoped, tag = 'input window, operand 0, single buffered']
    #allocation3 [shape = 's32[1]{0}', space=sflag, size = 0x4, scoped, tag = 'scoped memory for tpu_custom_call.1']
    #allocation4 [shape = 's32[1]{0}', space=sflag, size = 0x4, scoped, tag = 'scoped memory for tpu_custom_call.1']
    #allocation5 [shape = 'u8[4096]{0}', space=vmem, size = 0x1000, scoped, tag = 'input window, operand 2, single buffered']
    #allocation6 [shape = 's32[1]{0}', space=sflag, size = 0x4, scoped, tag = 'scoped memory for tpu_custom_call.1']
    #allocation7 [shape = 'u8[65536]{0}', space=vmem, size = 0x10000, scoped, tag = 'input window, operand 4, single buffered']
    #allocation8 [shape = 'u8[32768]{0}', space=vmem, size = 0x8000, scoped, tag = 'input window, operand 5, single buffered']
    #allocation9 [shape = 's32[1]{0}', space=sflag, size = 0x4, scoped, tag = 'scoped memory for tpu_custom_call.1']
    #allocation10 [shape = 'u8[65536]{0}', space=vmem, size = 0x10000, scoped, tag = 'input window, operand 6, single buffered']
    #allocation11 [shape = 'u8[65536]{0}', space=vmem, size = 0x10000, scoped, tag = 'input window, operand 7, single buffered']
    #allocation12 [shape = 's32[1]{0}', space=sflag, size = 0x4, scoped, tag = 'scoped memory for tpu_custom_call.1']
    #allocation13 [shape = 'u8[65536]{0}', space=vmem, size = 0x10000, scoped, tag = 'input window, operand 8, single buffered']
    #allocation14 [shape = 'u8[4096]{0}', space=vmem, size = 0x1000, scoped, tag = 'output window, operand 0, single buffered']
    %14 = vsyncpa [#allocation3], 0
    %15 = vsyncpa [#allocation6], 0
    %16 = vsyncpa [#allocation9], 0
    %17 = vsyncpa [#allocation12], 0
    %18 = vsyncpa [#allocation4], 0
    // Predicated region
    $region2: #{tpu_custom_call.1} parent=1 // pred_check
      _
    $region3: #{tpu_custom_call.1} parent=1 // pred_check_branch
      %20 = sbr.rel (0) target = $region5
    $region4: #{tpu_custom_call.1} parent=1 // pred_region
      %s22 = ssub.s32 128, 128
      %23 = vsyncadd [#allocation3], %s22
      %s25 = sshll.u32 [#allocation2], 4
      %s26 = int_to_ptr.vmem [resolvable:$true] %s25
      %28 = dma.hbm_to_vmem [thread:$0]  %s0, 128, %s26, [#allocation3]
    $region5: #{tpu_custom_call.1} parent=1 // pred_fallthru
      _
    // Predicated region
    $region6: #{tpu_custom_call.1} parent=1 // pred_check
      _
    $region7: #{tpu_custom_call.1} parent=1 // pred_check_branch
      %30 = sbr.rel (0) target = $region9
    $region8: #{tpu_custom_call.1} parent=1 // pred_region
      _
    $region9: #{tpu_custom_call.1} parent=1 // pred_fallthru
      _
    // Predicated region
    $region10: #{tpu_custom_call.1} parent=1 // pred_check
      _
    $region11: #{tpu_custom_call.1} parent=1 // pred_check_branch
      %32 = sbr.rel (0) target = $region13
    $region12: #{tpu_custom_call.1} parent=1 // pred_region
      %s34 = ssub.s32 128, 128
      %35 = vsyncadd [#allocation6], %s34
      %s37 = sshll.u32 [#allocation5], 4
      %s38 = int_to_ptr.vmem [resolvable:$true] %s37
      %40 = dma.hbm_to_vmem [thread:$0]  %s2, 128, %s38, [#allocation6]
    $region13: #{tpu_custom_call.1} parent=1 // pred_fallthru
      _
    // Predicated region
    $region14: #{tpu_custom_call.1} parent=1 // pred_check
      _
    $region15: #{tpu_custom_call.1} parent=1 // pred_check_branch
      %42 = sbr.rel (0) target = $region17
    $region16: #{tpu_custom_call.1} parent=1 // pred_region
      _
    $region17: #{tpu_custom_call.1} parent=1 // pred_fallthru
      _
    // Predicated region
    $region18: #{tpu_custom_call.1} parent=1 // pred_check
      _
    $region19: #{tpu_custom_call.1} parent=1 // pred_check_branch
      %44 = sbr.rel (0) target = $region21
    $region20: #{tpu_custom_call.1} parent=1 // pred_region
      %s46 = ssub.s32 2048, 2048
      %47 = vsyncadd [#allocation6], %s46
      %s48 = sshll.u32 [#allocation7], 4
      %s49 = int_to_ptr.vmem [resolvable:$true] %s48
      %54 = dma.hbm_to_vmem [thread:$0]  %s4, 2048, %s49, [#allocation6], 128, 128, 8
    $region21: #{tpu_custom_call.1} parent=1 // pred_fallthru
      _
    // Predicated region
    $region22: #{tpu_custom_call.1} parent=1 // pred_check
      _
    $region23: #{tpu_custom_call.1} parent=1 // pred_check_branch
      %56 = sbr.rel (0) target = $region25
    $region24: #{tpu_custom_call.1} parent=1 // pred_region
      %s58 = ssub.s32 1024, 1024
      %59 = vsyncadd [#allocation9], %s58
      %s60 = sshll.u32 [#allocation8], 4
      %s61 = int_to_ptr.vmem [resolvable:$true] %s60
      %66 = dma.hbm_to_vmem [thread:$0]  %s5, 1024, %s61, [#allocation9], 128, 128, 8
    $region25: #{tpu_custom_call.1} parent=1 // pred_fallthru
      _
    // Predicated region
    $region26: #{tpu_custom_call.1} parent=1 // pred_check
      _
    $region27: #{tpu_custom_call.1} parent=1 // pred_check_branch
      %68 = sbr.rel (0) target = $region29
    $region28: #{tpu_custom_call.1} parent=1 // pred_region
      %s70 = ssub.s32 2048, 2048
      %71 = vsyncadd [#allocation9], %s70
      %s72 = sshll.u32 [#allocation10], 4
      %s73 = int_to_ptr.vmem [resolvable:$true] %s72
      %78 = dma.hbm_to_vmem [thread:$0]  %s6, 2048, %s73, [#allocation9], 128, 128, 8
    $region29: #{tpu_custom_call.1} parent=1 // pred_fallthru
      _
    // Predicated region
    $region30: #{tpu_custom_call.1} parent=1 // pred_check
      _
    $region31: #{tpu_custom_call.1} parent=1 // pred_check_branch
      %80 = sbr.rel (0) target = $region33
    $region32: #{tpu_custom_call.1} parent=1 // pred_region
      %s82 = ssub.s32 2048, 2048
      %83 = vsyncadd [#allocation12], %s82
      %s84 = sshll.u32 [#allocation11], 4
      %s85 = int_to_ptr.vmem [resolvable:$true] %s84
      %90 = dma.hbm_to_vmem [thread:$0]  %s7, 2048, %s85, [#allocation12], 128, 128, 8
    $region33: #{tpu_custom_call.1} parent=1 // pred_fallthru
      _
    // Predicated region
    $region34: #{tpu_custom_call.1} parent=1 // pred_check
      _
    $region35: #{tpu_custom_call.1} parent=1 // pred_check_branch
      %92 = sbr.rel (0) target = $region37
    $region36: #{tpu_custom_call.1} parent=1 // pred_region
      %s94 = ssub.s32 2048, 2048
      %95 = vsyncadd [#allocation12], %s94
      %s96 = sshll.u32 [#allocation13], 4
      %s97 = int_to_ptr.vmem [resolvable:$true] %s96
      %102 = dma.hbm_to_vmem [thread:$0]  %s8, 2048, %s97, [#allocation12], 128, 128, 8
    $region37: #{tpu_custom_call.1} parent=1 // pred_fallthru
      _
    // Predicated region
    $region38: #{tpu_custom_call.1} parent=1 // pred_check
      _
    $region39: #{tpu_custom_call.1} parent=1 // pred_check_branch
      %104 = sbr.rel (0) target = $region41
    $region40: #{tpu_custom_call.1} parent=1 // pred_region
      %105 = dma.done [#allocation3], 128
    $region41: #{tpu_custom_call.1} parent=1 // pred_fallthru
      _
    // Predicated region
    $region42: #{tpu_custom_call.1} parent=1 // pred_check
      _
    $region43: #{tpu_custom_call.1} parent=1 // pred_check_branch
      %107 = sbr.rel (0) target = $region45
    $region44: #{tpu_custom_call.1} parent=1 // pred_region
      %108 = dma.done [#allocation6], 128
    $region45: #{tpu_custom_call.1} parent=1 // pred_fallthru
      _
    // Predicated region
    $region46: #{tpu_custom_call.1} parent=1 // pred_check
      _
    $region47: #{tpu_custom_call.1} parent=1 // pred_check_branch
      %110 = sbr.rel (0) target = $region49
    $region48: #{tpu_custom_call.1} parent=1 // pred_region
      %111 = dma.done [#allocation6], 2048
    $region49: #{tpu_custom_call.1} parent=1 // pred_fallthru
      _
    // Predicated region
    $region50: #{tpu_custom_call.1} parent=1 // pred_check
      _
    $region51: #{tpu_custom_call.1} parent=1 // pred_check_branch
      %113 = sbr.rel (0) target = $region53
    $region52: #{tpu_custom_call.1} parent=1 // pred_region
      %114 = dma.done [#allocation9], 1024
    $region53: #{tpu_custom_call.1} parent=1 // pred_fallthru
      _
    // Predicated region
    $region54: #{tpu_custom_call.1} parent=1 // pred_check
      _
    $region55: #{tpu_custom_call.1} parent=1 // pred_check_branch
      %116 = sbr.rel (0) target = $region57
    $region56: #{tpu_custom_call.1} parent=1 // pred_region
      %117 = dma.done [#allocation9], 2048
    $region57: #{tpu_custom_call.1} parent=1 // pred_fallthru
      _
    // Predicated region
    $region58: #{tpu_custom_call.1} parent=1 // pred_check
      _
    $region59: #{tpu_custom_call.1} parent=1 // pred_check_branch
      %119 = sbr.rel (0) target = $region61
    $region60: #{tpu_custom_call.1} parent=1 // pred_region
      %120 = dma.done [#allocation12], 2048
    $region61: #{tpu_custom_call.1} parent=1 // pred_fallthru
      _
    // Predicated region
    $region62: #{tpu_custom_call.1} parent=1 // pred_check
      _
    $region63: #{tpu_custom_call.1} parent=1 // pred_check_branch
      %122 = sbr.rel (0) target = $region65
    $region64: #{tpu_custom_call.1} parent=1 // pred_region
      %123 = dma.done [#allocation12], 2048
    $region65: #{tpu_custom_call.1} parent=1 // pred_fallthru
      _
    %v124 = vld [vmem:[#allocation2] sm:$0xff]
    %v125 = vld [vmem:[%s1] sm:$0xff]
    %v126 = vld [vmem:[#allocation5] sm:$0x1]
    %v127 = vld [vmem:[#allocation5 + $0x1] sm:$0x1]
    %v128 = vld [vmem:[#allocation5 + $0x2] sm:$0x1]
    %v129 = vld [vmem:[#allocation5 + $0x3] sm:$0x1]
    %v130 = vld [vmem:[#allocation5 + $0x4] sm:$0x1]
    %v131 = vld [vmem:[#allocation5 + $0x5] sm:$0x1]
    %v132 = vld [vmem:[#allocation5 + $0x6] sm:$0x1]
    %v133 = vld [vmem:[#allocation5 + $0x7] sm:$0x1]
    %v134 = vld [vmem:[%s3] sm:$0xff]
    %v135 = vld [vmem:[%s3 + $0x8] sm:$0xff]
    %v136 = vlaneseq
    %v137 = vshrl.u32 %v136, 7
    %v138 = vsub.s32 0, %v137
    %v139 = vrot.slane %v126, %v138
    %vm140 = vcmask 130048
    %v142 = vsel %vm140, %v124, 0
    %144 = vmatprep.subr.mxu0 0.0
    %145 = vmatpush1.msra.mxu0 %v134
    %146 = vmatprep.subr.mxu0 0.0
    %147 = vmatpush1.msra.mxu0 %v135
    %148 = vmatprep.subr.mxu0 0.0
    %149 = vmatpush1.msra.mxu0 0.0
    %150 = vmatprep.subr.mxu0 0.0
    %151 = vmatpush1.msra.mxu0 0.0
    %152 = vmatprep.subr.mxu0 0.0
    %153 = vmatpush1.msra.mxu0 0.0
    %154 = vmatprep.subr.mxu0 0.0
    %155 = vmatpush1.msra.mxu0 0.0
    %156 = vmatprep.subr.mxu0 0.0
    %157 = vmatpush1.msra.mxu0 0.0
    %158 = vmatprep.subr.mxu0 0.0
    %159 = vmatpush1.msra.mxu0 0.0
    %160 = vmatprep.subr.mxu0 0.0
    %161 = vmatpush1.msra.mxu0 0.0
    %162 = vmatprep.subr.mxu0 0.0
    %163 = vmatpush1.msra.mxu0 0.0
    %164 = vmatprep.subr.mxu0 0.0
    %165 = vmatpush1.msra.mxu0 0.0
    %166 = vmatprep.subr.mxu0 0.0
    %167 = vmatpush1.msra.mxu0 0.0
    %168 = vmatprep.subr.mxu0 0.0
    %169 = vmatpush1.msra.mxu0 0.0
    %170 = vmatprep.subr.mxu0 0.0
    %171 = vmatpush1.msra.mxu0 0.0
    %172 = vmatprep.subr.mxu0 0.0
    %173 = vmatpush1.msra.mxu0 0.0
    %174 = vmatprep.subr.mxu0 0.0
    %175 = vmatpush1.msra.mxu0 0.0
    %176 = vmatprep.subr.mxu0 0.0
    %177 = vmatpush1.msra.mxu0 0.0
    %178 = vmatprep.subr.mxu0 0.0
    %179 = vmatpush1.msra.mxu0 0.0
    %180 = vmatprep.subr.mxu0 0.0
    %181 = vmatpush1.msra.mxu0 0.0
    %182 = vmatprep.subr.mxu0 0.0
    %183 = vmatpush1.msra.mxu0 0.0
    %184 = vmatprep.subr.mxu0 0.0
    %185 = vmatpush1.msra.mxu0 0.0
    %186 = vmatprep.subr.mxu0 0.0
    %187 = vmatpush1.msra.mxu0 0.0
    %188 = vmatprep.subr.mxu0 0.0
    %189 = vmatpush1.msra.mxu0 0.0
    %190 = vmatprep.subr.mxu0 0.0
    %191 = vmatpush1.msra.mxu0 0.0
    %192 = vmatprep.subr.mxu0 0.0
    %193 = vmatpush1.msra.mxu0 0.0
    %194 = vmatprep.subr.mxu0 0.0
    %195 = vmatpush1.msra.mxu0 0.0
    %196 = vmatprep.subr.mxu0 0.0
    %197 = vmatpush1.msra.mxu0 0.0
    %198 = vmatprep.subr.mxu0 0.0
    %199 = vmatpush1.msra.mxu0 0.0
    %200 = vmatprep.subr.mxu0 0.0
    %201 = vmatpush1.msra.mxu0 0.0
    %202 = vmatprep.subr.mxu0 0.0
    %203 = vmatpush1.msra.mxu0 0.0
    %204 = vmatprep.subr.mxu0 0.0
    %205 = vmatpush1.msra.mxu0 0.0
    %206 = vmatprep.subr.mxu0 0.0
    %207 = vmatpush1.msra.mxu0 0.0
    %208 = vmatprep.mubr.f32.mxu0 0.0
    %209 = vmatmul.mubr.f32.gmra.mrb[0].mxu0 %v142
    %v210 = vpop.f32.mrb[0].mxu0
    %v211 = vadd.f32 %v139, %v210
    %v212 = vpop.f32.mrb[0].mxu0
    %213 = vdwg.mxu0
    %v214 = vmax.f32 %v211, 0.0
    %v215 = vld [vmem:[#allocation7] sm:$0xff]
    %v216 = vld [vmem:[#allocation7 + $0x8] sm:$0xff]
    %v217 = vld [vmem:[#allocation7 + $0x10] sm:$0xff]
    %v218 = vld [vmem:[#allocation7 + $0x18] sm:$0xff]
    %v219 = vld [vmem:[#allocation7 + $0x20] sm:$0xff]
    %v220 = vld [vmem:[#allocation7 + $0x28] sm:$0xff]
    %v221 = vld [vmem:[#allocation7 + $0x30] sm:$0xff]
    %v222 = vld [vmem:[#allocation7 + $0x38] sm:$0xff]
    %v223 = vld [vmem:[#allocation7 + $0x40] sm:$0xff]
    %v224 = vld [vmem:[#allocation7 + $0x48] sm:$0xff]
    %v225 = vld [vmem:[#allocation7 + $0x50] sm:$0xff]
    %v226 = vld [vmem:[#allocation7 + $0x58] sm:$0xff]
    %v227 = vld [vmem:[#allocation7 + $0x60] sm:$0xff]
    %v228 = vld [vmem:[#allocation7 + $0x68] sm:$0xff]
    %v229 = vld [vmem:[#allocation7 + $0x70] sm:$0xff]
    %v230 = vld [vmem:[#allocation7 + $0x78] sm:$0xff]
    %v231 = vlaneseq
    %v232 = vshrl.u32 %v231, 7
    %v233 = vsub.s32 0, %v232
    %v234 = vrot.slane %v127, %v233
    %235 = vmatprep.subr.mxu0 0.0
    %236 = vmatpush1.msra.mxu0 %v215
    %237 = vmatprep.subr.mxu0 0.0
    %238 = vmatpush1.msra.mxu0 %v216
    %239 = vmatprep.subr.mxu0 0.0
    %240 = vmatpush1.msra.mxu0 %v217
    %241 = vmatprep.subr.mxu0 0.0
    %242 = vmatpush1.msra.mxu0 %v218
    %243 = vmatprep.subr.mxu0 0.0
    %244 = vmatpush1.msra.mxu0 %v219
    %245 = vmatprep.subr.mxu0 0.0
    %246 = vmatpush1.msra.mxu0 %v220
    %247 = vmatprep.subr.mxu0 0.0
    %248 = vmatpush1.msra.mxu0 %v221
    %249 = vmatprep.subr.mxu0 0.0
    %250 = vmatpush1.msra.mxu0 %v222
    %251 = vmatprep.subr.mxu0 0.0
    %252 = vmatpush1.msra.mxu0 %v223
    %253 = vmatprep.subr.mxu0 0.0
    %254 = vmatpush1.msra.mxu0 %v224
    %255 = vmatprep.subr.mxu0 0.0
    %256 = vmatpush1.msra.mxu0 %v225
    %257 = vmatprep.subr.mxu0 0.0
    %258 = vmatpush1.msra.mxu0 %v226
    %259 = vmatprep.subr.mxu0 0.0
    %260 = vmatpush1.msra.mxu0 %v227
    %261 = vmatprep.subr.mxu0 0.0
    %262 = vmatpush1.msra.mxu0 %v228
    %263 = vmatprep.subr.mxu0 0.0
    %264 = vmatpush1.msra.mxu0 %v229
    %265 = vmatprep.subr.mxu0 0.0
    %266 = vmatpush1.msra.mxu0 %v230
    %267 = vmatprep.subr.mxu0 0.0
    %268 = vmatpush1.msra.mxu0 0.0
    %269 = vmatprep.subr.mxu0 0.0
    %270 = vmatpush1.msra.mxu0 0.0
    %271 = vmatprep.subr.mxu0 0.0
    %272 = vmatpush1.msra.mxu0 0.0
    %273 = vmatprep.subr.mxu0 0.0
    %274 = vmatpush1.msra.mxu0 0.0
    %275 = vmatprep.subr.mxu0 0.0
    %276 = vmatpush1.msra.mxu0 0.0
    %277 = vmatprep.subr.mxu0 0.0
    %278 = vmatpush1.msra.mxu0 0.0
    %279 = vmatprep.subr.mxu0 0.0
    %280 = vmatpush1.msra.mxu0 0.0
    %281 = vmatprep.subr.mxu0 0.0
    %282 = vmatpush1.msra.mxu0 0.0
    %283 = vmatprep.subr.mxu0 0.0
    %284 = vmatpush1.msra.mxu0 0.0
    %285 = vmatprep.subr.mxu0 0.0
    %286 = vmatpush1.msra.mxu0 0.0
    %287 = vmatprep.subr.mxu0 0.0
    %288 = vmatpush1.msra.mxu0 0.0
    %289 = vmatprep.subr.mxu0 0.0
    %290 = vmatpush1.msra.mxu0 0.0
    %291 = vmatprep.subr.mxu0 0.0
    %292 = vmatpush1.msra.mxu0 0.0
    %293 = vmatprep.subr.mxu0 0.0
    %294 = vmatpush1.msra.mxu0 0.0
    %295 = vmatprep.subr.mxu0 0.0
    %296 = vmatpush1.msra.mxu0 0.0
    %297 = vmatprep.subr.mxu0 0.0
    %298 = vmatpush1.msra.mxu0 0.0
    %299 = vmatprep.mubr.f32.mxu0 0.0
    %300 = vmatmul.mubr.f32.gmra.mrb[0].mxu0 %v214
    %v301 = vpop.f32.mrb[0].mxu0
    %v302 = vadd.f32 %v234, %v301
    %v303 = vpop.f32.mrb[0].mxu0
    %304 = vdwg.mxu0
    %306 = vset.pattern.permute.xlu0 0
    %307 = vperm.xlu0 %306, %v125
    %v308 = vpop.permute.xlu0 %307
    %v310 = vlaneseq
    %v311 = vshrl.u32 %v310, 7
    %v312 = vsub.s32 0, %v311
    %v313 = vrot.slane %v133, %v312
    %v314 = vmul.f32 %v308, %v313
    %v315 = vlaneseq
    %v316 = vshrl.u32 %v315, 7
    %v317 = vsub.s32 0, %v316
    %v318 = vrot.slane %v128, %v317
    %v319 = vadd.f32 %v314, %v318
    %v320 = vmax.f32 %v319, 0.0
    %v321 = vld [vmem:[#allocation8] sm:$0xff]
    %v322 = vld [vmem:[#allocation8 + $0x8] sm:$0xff]
    %v323 = vld [vmem:[#allocation8 + $0x10] sm:$0xff]
    %v324 = vld [vmem:[#allocation8 + $0x18] sm:$0xff]
    %v325 = vld [vmem:[#allocation8 + $0x20] sm:$0xff]
    %v326 = vld [vmem:[#allocation8 + $0x28] sm:$0xff]
    %v327 = vld [vmem:[#allocation8 + $0x30] sm:$0xff]
    %v328 = vld [vmem:[#allocation8 + $0x38] sm:$0xff]
    %v329 = vlaneseq
    %v330 = vshrl.u32 %v329, 7
    %v331 = vsub.s32 0, %v330
    %v332 = vrot.slane %v129, %v331
    %vm333 = vcmask 523264
    %v335 = vsel %vm333, %v320, 0
    %337 = vmatprep.subr.mxu0 0.0
    %338 = vmatpush1.msra.mxu0 %v321
    %339 = vmatprep.subr.mxu0 0.0
    %340 = vmatpush1.msra.mxu0 %v322
    %341 = vmatprep.subr.mxu0 0.0
    %342 = vmatpush1.msra.mxu0 %v323
    %343 = vmatprep.subr.mxu0 0.0
    %344 = vmatpush1.msra.mxu0 %v324
    %345 = vmatprep.subr.mxu0 0.0
    %346 = vmatpush1.msra.mxu0 %v325
    %347 = vmatprep.subr.mxu0 0.0
    %348 = vmatpush1.msra.mxu0 %v326
    %349 = vmatprep.subr.mxu0 0.0
    %350 = vmatpush1.msra.mxu0 %v327
    %351 = vmatprep.subr.mxu0 0.0
    %352 = vmatpush1.msra.mxu0 %v328
    %353 = vmatprep.subr.mxu0 0.0
    %354 = vmatpush1.msra.mxu0 0.0
    %355 = vmatprep.subr.mxu0 0.0
    %356 = vmatpush1.msra.mxu0 0.0
    %357 = vmatprep.subr.mxu0 0.0
    %358 = vmatpush1.msra.mxu0 0.0
    %359 = vmatprep.subr.mxu0 0.0
    %360 = vmatpush1.msra.mxu0 0.0
    %361 = vmatprep.subr.mxu0 0.0
    %362 = vmatpush1.msra.mxu0 0.0
    %363 = vmatprep.subr.mxu0 0.0
    %364 = vmatpush1.msra.mxu0 0.0
    %365 = vmatprep.subr.mxu0 0.0
    %366 = vmatpush1.msra.mxu0 0.0
    %367 = vmatprep.subr.mxu0 0.0
    %368 = vmatpush1.msra.mxu0 0.0
    %369 = vmatprep.subr.mxu0 0.0
    %370 = vmatpush1.msra.mxu0 0.0
    %371 = vmatprep.subr.mxu0 0.0
    %372 = vmatpush1.msra.mxu0 0.0
    %373 = vmatprep.subr.mxu0 0.0
    %374 = vmatpush1.msra.mxu0 0.0
    %375 = vmatprep.subr.mxu0 0.0
    %376 = vmatpush1.msra.mxu0 0.0
    %377 = vmatprep.subr.mxu0 0.0
    %378 = vmatpush1.msra.mxu0 0.0
    %379 = vmatprep.subr.mxu0 0.0
    %380 = vmatpush1.msra.mxu0 0.0
    %381 = vmatprep.subr.mxu0 0.0
    %382 = vmatpush1.msra.mxu0 0.0
    %383 = vmatprep.subr.mxu0 0.0
    %384 = vmatpush1.msra.mxu0 0.0
    %385 = vmatprep.subr.mxu0 0.0
    %386 = vmatpush1.msra.mxu0 0.0
    %387 = vmatprep.subr.mxu0 0.0
    %388 = vmatpush1.msra.mxu0 0.0
    %389 = vmatprep.subr.mxu0 0.0
    %390 = vmatpush1.msra.mxu0 0.0
    %391 = vmatprep.subr.mxu0 0.0
    %392 = vmatpush1.msra.mxu0 0.0
    %393 = vmatprep.subr.mxu0 0.0
    %394 = vmatpush1.msra.mxu0 0.0
    %395 = vmatprep.subr.mxu0 0.0
    %396 = vmatpush1.msra.mxu0 0.0
    %397 = vmatprep.subr.mxu0 0.0
    %398 = vmatpush1.msra.mxu0 0.0
    %399 = vmatprep.subr.mxu0 0.0
    %400 = vmatpush1.msra.mxu0 0.0
    %401 = vmatprep.mubr.f32.mxu0 0.0
    %402 = vmatmul.mubr.f32.gmra.mrb[0].mxu0 %v335
    %v403 = vpop.f32.mrb[0].mxu0
    %v404 = vadd.f32 %v332, %v403
    %v405 = vpop.f32.mrb[0].mxu0
    %406 = vdwg.mxu0
    %v407 = vadd.f32 %v302, %v404
    %v408 = vld [vmem:[#allocation10] sm:$0xff]
    %v409 = vld [vmem:[#allocation10 + $0x8] sm:$0xff]
    %v410 = vld [vmem:[#allocation10 + $0x10] sm:$0xff]
    %v411 = vld [vmem:[#allocation10 + $0x18] sm:$0xff]
    %v412 = vld [vmem:[#allocation10 + $0x20] sm:$0xff]
    %v413 = vld [vmem:[#allocation10 + $0x28] sm:$0xff]
    %v414 = vld [vmem:[#allocation10 + $0x30] sm:$0xff]
    %v415 = vld [vmem:[#allocation10 + $0x38] sm:$0xff]
    %v416 = vld [vmem:[#allocation10 + $0x40] sm:$0xff]
    %v417 = vld [vmem:[#allocation10 + $0x48] sm:$0xff]
    %v418 = vld [vmem:[#allocation10 + $0x50] sm:$0xff]
    %v419 = vld [vmem:[#allocation10 + $0x58] sm:$0xff]
    %v420 = vld [vmem:[#allocation10 + $0x60] sm:$0xff]
    %v421 = vld [vmem:[#allocation10 + $0x68] sm:$0xff]
    %v422 = vld [vmem:[#allocation10 + $0x70] sm:$0xff]
    %v423 = vld [vmem:[#allocation10 + $0x78] sm:$0xff]
    %v424 = vlaneseq
    %v425 = vshrl.u32 %v424, 7
    %v426 = vsub.s32 0, %v425
    %v427 = vrot.slane %v130, %v426
    %428 = vmatprep.subr.mxu0 0.0
    %429 = vmatpush1.msra.mxu0 %v408
    %430 = vmatprep.subr.mxu0 0.0
    %431 = vmatpush1.msra.mxu0 %v409
    %432 = vmatprep.subr.mxu0 0.0
    %433 = vmatpush1.msra.mxu0 %v410
    %434 = vmatprep.subr.mxu0 0.0
    %435 = vmatpush1.msra.mxu0 %v411
    %436 = vmatprep.subr.mxu0 0.0
    %437 = vmatpush1.msra.mxu0 %v412
    %438 = vmatprep.subr.mxu0 0.0
    %439 = vmatpush1.msra.mxu0 %v413
    %440 = vmatprep.subr.mxu0 0.0
    %441 = vmatpush1.msra.mxu0 %v414
    %442 = vmatprep.subr.mxu0 0.0
    %443 = vmatpush1.msra.mxu0 %v415
    %444 = vmatprep.subr.mxu0 0.0
    %445 = vmatpush1.msra.mxu0 %v416
    %446 = vmatprep.subr.mxu0 0.0
    %447 = vmatpush1.msra.mxu0 %v417
    %448 = vmatprep.subr.mxu0 0.0
    %449 = vmatpush1.msra.mxu0 %v418
    %450 = vmatprep.subr.mxu0 0.0
    %451 = vmatpush1.msra.mxu0 %v419
    %452 = vmatprep.subr.mxu0 0.0
    %453 = vmatpush1.msra.mxu0 %v420
    %454 = vmatprep.subr.mxu0 0.0
    %455 = vmatpush1.msra.mxu0 %v421
    %456 = vmatprep.subr.mxu0 0.0
    %457 = vmatpush1.msra.mxu0 %v422
    %458 = vmatprep.subr.mxu0 0.0
    %459 = vmatpush1.msra.mxu0 %v423
    %460 = vmatprep.subr.mxu0 0.0
    %461 = vmatpush1.msra.mxu0 0.0
    %462 = vmatprep.subr.mxu0 0.0
    %463 = vmatpush1.msra.mxu0 0.0
    %464 = vmatprep.subr.mxu0 0.0
    %465 = vmatpush1.msra.mxu0 0.0
    %466 = vmatprep.subr.mxu0 0.0
    %467 = vmatpush1.msra.mxu0 0.0
    %468 = vmatprep.subr.mxu0 0.0
    %469 = vmatpush1.msra.mxu0 0.0
    %470 = vmatprep.subr.mxu0 0.0
    %471 = vmatpush1.msra.mxu0 0.0
    %472 = vmatprep.subr.mxu0 0.0
    %473 = vmatpush1.msra.mxu0 0.0
    %474 = vmatprep.subr.mxu0 0.0
    %475 = vmatpush1.msra.mxu0 0.0
    %476 = vmatprep.subr.mxu0 0.0
    %477 = vmatpush1.msra.mxu0 0.0
    %478 = vmatprep.subr.mxu0 0.0
    %479 = vmatpush1.msra.mxu0 0.0
    %480 = vmatprep.subr.mxu0 0.0
    %481 = vmatpush1.msra.mxu0 0.0
    %482 = vmatprep.subr.mxu0 0.0
    %483 = vmatpush1.msra.mxu0 0.0
    %484 = vmatprep.subr.mxu0 0.0
    %485 = vmatpush1.msra.mxu0 0.0
    %486 = vmatprep.subr.mxu0 0.0
    %487 = vmatpush1.msra.mxu0 0.0
    %488 = vmatprep.subr.mxu0 0.0
    %489 = vmatpush1.msra.mxu0 0.0
    %490 = vmatprep.subr.mxu0 0.0
    %491 = vmatpush1.msra.mxu0 0.0
    %492 = vmatprep.mubr.f32.mxu0 0.0
    %493 = vmatmul.mubr.f32.gmra.mrb[0].mxu0 %v407
    %v494 = vpop.f32.mrb[0].mxu0
    %v495 = vadd.f32 %v427, %v494
    %v496 = vpop.f32.mrb[0].mxu0
    %497 = vdwg.mxu0
    %v498 = vmax.f32 %v495, 0.0
    %v499 = vld [vmem:[#allocation11] sm:$0xff]
    %v500 = vld [vmem:[#allocation11 + $0x8] sm:$0xff]
    %v501 = vld [vmem:[#allocation11 + $0x10] sm:$0xff]
    %v502 = vld [vmem:[#allocation11 + $0x18] sm:$0xff]
    %v503 = vld [vmem:[#allocation11 + $0x20] sm:$0xff]
    %v504 = vld [vmem:[#allocation11 + $0x28] sm:$0xff]
    %v505 = vld [vmem:[#allocation11 + $0x30] sm:$0xff]
    %v506 = vld [vmem:[#allocation11 + $0x38] sm:$0xff]
    %v507 = vld [vmem:[#allocation11 + $0x40] sm:$0xff]
    %v508 = vld [vmem:[#allocation11 + $0x48] sm:$0xff]
    %v509 = vld [vmem:[#allocation11 + $0x50] sm:$0xff]
    %v510 = vld [vmem:[#allocation11 + $0x58] sm:$0xff]
    %v511 = vld [vmem:[#allocation11 + $0x60] sm:$0xff]
    %v512 = vld [vmem:[#allocation11 + $0x68] sm:$0xff]
    %v513 = vld [vmem:[#allocation11 + $0x70] sm:$0xff]
    %v514 = vld [vmem:[#allocation11 + $0x78] sm:$0xff]
    %v515 = vlaneseq
    %v516 = vshrl.u32 %v515, 7
    %v517 = vsub.s32 0, %v516
    %v518 = vrot.slane %v131, %v517
    %519 = vmatprep.subr.mxu0 0.0
    %520 = vmatpush1.msra.mxu0 %v499
    %521 = vmatprep.subr.mxu0 0.0
    %522 = vmatpush1.msra.mxu0 %v500
    %523 = vmatprep.subr.mxu0 0.0
    %524 = vmatpush1.msra.mxu0 %v501
    %525 = vmatprep.subr.mxu0 0.0
    %526 = vmatpush1.msra.mxu0 %v502
    %527 = vmatprep.subr.mxu0 0.0
    %528 = vmatpush1.msra.mxu0 %v503
    %529 = vmatprep.subr.mxu0 0.0
    %530 = vmatpush1.msra.mxu0 %v504
    %531 = vmatprep.subr.mxu0 0.0
    %532 = vmatpush1.msra.mxu0 %v505
    %533 = vmatprep.subr.mxu0 0.0
    %534 = vmatpush1.msra.mxu0 %v506
    %535 = vmatprep.subr.mxu0 0.0
    %536 = vmatpush1.msra.mxu0 %v507
    %537 = vmatprep.subr.mxu0 0.0
    %538 = vmatpush1.msra.mxu0 %v508
    %539 = vmatprep.subr.mxu0 0.0
    %540 = vmatpush1.msra.mxu0 %v509
    %541 = vmatprep.subr.mxu0 0.0
    %542 = vmatpush1.msra.mxu0 %v510
    %543 = vmatprep.subr.mxu0 0.0
    %544 = vmatpush1.msra.mxu0 %v511
    %545 = vmatprep.subr.mxu0 0.0
    %546 = vmatpush1.msra.mxu0 %v512
    %547 = vmatprep.subr.mxu0 0.0
    %548 = vmatpush1.msra.mxu0 %v513
    %549 = vmatprep.subr.mxu0 0.0
    %550 = vmatpush1.msra.mxu0 %v514
    %551 = vmatprep.subr.mxu0 0.0
    %552 = vmatpush1.msra.mxu0 0.0
    %553 = vmatprep.subr.mxu0 0.0
    %554 = vmatpush1.msra.mxu0 0.0
    %555 = vmatprep.subr.mxu0 0.0
    %556 = vmatpush1.msra.mxu0 0.0
    %557 = vmatprep.subr.mxu0 0.0
    %558 = vmatpush1.msra.mxu0 0.0
    %559 = vmatprep.subr.mxu0 0.0
    %560 = vmatpush1.msra.mxu0 0.0
    %561 = vmatprep.subr.mxu0 0.0
    %562 = vmatpush1.msra.mxu0 0.0
    %563 = vmatprep.subr.mxu0 0.0
    %564 = vmatpush1.msra.mxu0 0.0
    %565 = vmatprep.subr.mxu0 0.0
    %566 = vmatpush1.msra.mxu0 0.0
    %567 = vmatprep.subr.mxu0 0.0
    %568 = vmatpush1.msra.mxu0 0.0
    %569 = vmatprep.subr.mxu0 0.0
    %570 = vmatpush1.msra.mxu0 0.0
    %571 = vmatprep.subr.mxu0 0.0
    %572 = vmatpush1.msra.mxu0 0.0
    %573 = vmatprep.subr.mxu0 0.0
    %574 = vmatpush1.msra.mxu0 0.0
    %575 = vmatprep.subr.mxu0 0.0
    %576 = vmatpush1.msra.mxu0 0.0
    %577 = vmatprep.subr.mxu0 0.0
    %578 = vmatpush1.msra.mxu0 0.0
    %579 = vmatprep.subr.mxu0 0.0
    %580 = vmatpush1.msra.mxu0 0.0
    %581 = vmatprep.subr.mxu0 0.0
    %582 = vmatpush1.msra.mxu0 0.0
    %583 = vmatprep.mubr.f32.mxu0 0.0
    %584 = vmatmul.mubr.f32.gmra.mrb[0].mxu0 %v498
    %v585 = vpop.f32.mrb[0].mxu0
    %v586 = vadd.f32 %v518, %v585
    %v587 = vpop.f32.mrb[0].mxu0
    %588 = vdwg.mxu0
    %v589 = vld [vmem:[#allocation13] sm:$0xff]
    %v590 = vld [vmem:[#allocation13 + $0x8] sm:$0xff]
    %v591 = vld [vmem:[#allocation13 + $0x10] sm:$0xff]
    %v592 = vld [vmem:[#allocation13 + $0x18] sm:$0xff]
    %v593 = vld [vmem:[#allocation13 + $0x20] sm:$0xff]
    %v594 = vld [vmem:[#allocation13 + $0x28] sm:$0xff]
    %v595 = vld [vmem:[#allocation13 + $0x30] sm:$0xff]
    %v596 = vld [vmem:[#allocation13 + $0x38] sm:$0xff]
    %v597 = vld [vmem:[#allocation13 + $0x40] sm:$0xff]
    %v598 = vld [vmem:[#allocation13 + $0x48] sm:$0xff]
    %v599 = vld [vmem:[#allocation13 + $0x50] sm:$0xff]
    %v600 = vld [vmem:[#allocation13 + $0x58] sm:$0xff]
    %v601 = vld [vmem:[#allocation13 + $0x60] sm:$0xff]
    %v602 = vld [vmem:[#allocation13 + $0x68] sm:$0xff]
    %v603 = vld [vmem:[#allocation13 + $0x70] sm:$0xff]
    %v604 = vld [vmem:[#allocation13 + $0x78] sm:$0xff]
    %v605 = vlaneseq
    %v606 = vshrl.u32 %v605, 7
    %v607 = vsub.s32 0, %v606
    %v608 = vrot.slane %v132, %v607
    %609 = vmatprep.subr.mxu0 0.0
    %610 = vmatpush1.msra.mxu0 %v589
    %611 = vmatprep.subr.mxu0 0.0
    %612 = vmatpush1.msra.mxu0 %v590
    %613 = vmatprep.subr.mxu0 0.0
    %614 = vmatpush1.msra.mxu0 %v591
    %615 = vmatprep.subr.mxu0 0.0
    %616 = vmatpush1.msra.mxu0 %v592
    %617 = vmatprep.subr.mxu0 0.0
    %618 = vmatpush1.msra.mxu0 %v593
    %619 = vmatprep.subr.mxu0 0.0
    %620 = vmatpush1.msra.mxu0 %v594
    %621 = vmatprep.subr.mxu0 0.0
    %622 = vmatpush1.msra.mxu0 %v595
    %623 = vmatprep.subr.mxu0 0.0
    %624 = vmatpush1.msra.mxu0 %v596
    %625 = vmatprep.subr.mxu0 0.0
    %626 = vmatpush1.msra.mxu0 %v597
    %627 = vmatprep.subr.mxu0 0.0
    %628 = vmatpush1.msra.mxu0 %v598
    %629 = vmatprep.subr.mxu0 0.0
    %630 = vmatpush1.msra.mxu0 %v599
    %631 = vmatprep.subr.mxu0 0.0
    %632 = vmatpush1.msra.mxu0 %v600
    %633 = vmatprep.subr.mxu0 0.0
    %634 = vmatpush1.msra.mxu0 %v601
    %635 = vmatprep.subr.mxu0 0.0
    %636 = vmatpush1.msra.mxu0 %v602
    %637 = vmatprep.subr.mxu0 0.0
    %638 = vmatpush1.msra.mxu0 %v603
    %639 = vmatprep.subr.mxu0 0.0
    %640 = vmatpush1.msra.mxu0 %v604
    %641 = vmatprep.subr.mxu0 0.0
    %642 = vmatpush1.msra.mxu0 0.0
    %643 = vmatprep.subr.mxu0 0.0
    %644 = vmatpush1.msra.mxu0 0.0
    %645 = vmatprep.subr.mxu0 0.0
    %646 = vmatpush1.msra.mxu0 0.0
    %647 = vmatprep.subr.mxu0 0.0
    %648 = vmatpush1.msra.mxu0 0.0
    %649 = vmatprep.subr.mxu0 0.0
    %650 = vmatpush1.msra.mxu0 0.0
    %651 = vmatprep.subr.mxu0 0.0
    %652 = vmatpush1.msra.mxu0 0.0
    %653 = vmatprep.subr.mxu0 0.0
    %654 = vmatpush1.msra.mxu0 0.0
    %655 = vmatprep.subr.mxu0 0.0
    %656 = vmatpush1.msra.mxu0 0.0
    %657 = vmatprep.subr.mxu0 0.0
    %658 = vmatpush1.msra.mxu0 0.0
    %659 = vmatprep.subr.mxu0 0.0
    %660 = vmatpush1.msra.mxu0 0.0
    %661 = vmatprep.subr.mxu0 0.0
    %662 = vmatpush1.msra.mxu0 0.0
    %663 = vmatprep.subr.mxu0 0.0
    %664 = vmatpush1.msra.mxu0 0.0
    %665 = vmatprep.subr.mxu0 0.0
    %666 = vmatpush1.msra.mxu0 0.0
    %667 = vmatprep.subr.mxu0 0.0
    %668 = vmatpush1.msra.mxu0 0.0
    %669 = vmatprep.subr.mxu0 0.0
    %670 = vmatpush1.msra.mxu0 0.0
    %671 = vmatprep.subr.mxu0 0.0
    %672 = vmatpush1.msra.mxu0 0.0
    %673 = vmatprep.mubr.f32.mxu0 0.0
    %674 = vmatmul.mubr.f32.gmra.mrb[0].mxu0 %v586
    %v675 = vpop.f32.mrb[0].mxu0
    %v676 = vadd.f32 %v608, %v675
    %v677 = vpop.f32.mrb[0].mxu0
    %678 = vdwg.mxu0
    %679 = vst [vmem:[#allocation14] sm:$0xff] %v676
    // Predicated region
    $region66: #{tpu_custom_call.1} parent=1 // pred_check
      _
    $region67: #{tpu_custom_call.1} parent=1 // pred_check_branch
      %681 = sbr.rel (0) target = $region69
    $region68: #{tpu_custom_call.1} parent=1 // pred_region
      %s683 = ssub.s32 128, 128
      %684 = vsyncadd [#allocation4], %s683
      %s686 = sshll.u32 [#allocation14], 4
      %s687 = int_to_ptr.vmem [resolvable:$true] %s686
      %689 = dma.vmem_to_hbm [thread:$0]  %s687, 128, %s9, [#allocation4]
    $region69: #{tpu_custom_call.1} parent=1 // pred_fallthru
      _
    // Predicated region
    $region70: #{tpu_custom_call.1} parent=1 // pred_check
      _
    $region71: #{tpu_custom_call.1} parent=1 // pred_check_branch
      %691 = sbr.rel (0) target = $region73
    $region72: #{tpu_custom_call.1} parent=1 // pred_region
      %692 = dma.done [#allocation4], 128
    $region73: #{tpu_custom_call.1} parent=1 // pred_fallthru
      _
    %693 = vsyncpa [#allocation3], 1
    %694 = vsyncpa [#allocation6], 1
    %695 = vsyncpa [#allocation9], 1
    %696 = vsyncpa [#allocation12], 1
    %697 = vsyncpa [#allocation4], 1

</llo_original>
